<compile_context>
chip_gen: v7x
topology: tpu7x:2x2x1
jax: 0.10.0
libtpu: 0.0.40
codegen_flags: <defaults>
</compile_context>

<pallas_src>
import jax
import jax.numpy as jnp
from jax.experimental import pallas as pl
from jax.experimental.pallas import tpu as pltpu

LANES = 128


def mlp_text_kernel(x_ref, w1_ref, b1_ref, w2_ref, b2_ref, o_ref):
    # fc1: [TB, D](bf16) @ [D, H](bf16) -> f32 accumulate, f32 bias, ReLU.
    h = jnp.dot(x_ref[...], w1_ref[...], preferred_element_type=jnp.float32)
    h = jnp.maximum(h + b1_ref[...], 0.0)
    # fc2: deliberately quantize the f32 activations to bf16 for the MXU,
    # accumulate in f32, add f32 bias.
    out = jnp.dot(h.astype(jnp.bfloat16), w2_ref[...],
                  preferred_element_type=jnp.float32)
    out = out + b2_ref[...]
    o_ref[...] = out.astype(o_ref.dtype)


def mlp_text_forward(x, w1, b1, w2, b2):
    """x: [B, D]; w1: [D, H] bf16; b1: [1, H] f32; w2: [H, C] bf16; b2: [1, C] f32
    -> [B, C] f32 (fc1 -> ReLU -> fc2)."""
    B, D = x.shape
    H = w1.shape[1]
    C = w2.shape[1]

    # Lane-dense output: pad class dim to a multiple of 128.
    C_pad = ((C + LANES - 1) // LANES) * LANES
    w2p = jnp.pad(w2, ((0, 0), (0, C_pad - C))).astype(jnp.bfloat16)
    b2p = jnp.pad(b2, ((0, 0), (0, C_pad - C))).astype(jnp.float32)

    # Batch tiling: big tiles when the batch is large (fills MXU rows and
    # pipelines x DMA against compute); otherwise a single sublane-aligned tile.
    # Tile cap of 2048 rows keeps double-buffered bf16 x-blocks well inside
    # v7x's smaller (64 MiB) VMEM as well as v5e/v6e.
    if B >= 256:
        TB = min(2048, (B // 256) * 256)
    else:
        TB = ((B + 7) // 8) * 8
    B_pad = ((B + TB - 1) // TB) * TB

    xb = x.astype(jnp.bfloat16)
    if B_pad != B:
        xb = jnp.pad(xb, ((0, B_pad - B), (0, 0)))

    out = pl.pallas_call(
        mlp_text_kernel,
        out_shape=jax.ShapeDtypeStruct((B_pad, C_pad), jnp.float32),
        grid=(B_pad // TB,),
        in_specs=[
            pl.BlockSpec((TB, D), lambda i: (i, 0)),     # x tile, streamed
            pl.BlockSpec((D, H), lambda i: (0, 0)),      # w1, resident
            pl.BlockSpec((1, H), lambda i: (0, 0)),      # b1, resident
            pl.BlockSpec((H, C_pad), lambda i: (0, 0)),  # w2 (padded), resident
            pl.BlockSpec((1, C_pad), lambda i: (0, 0)),  # b2 (padded), resident
        ],
        out_specs=pl.BlockSpec((TB, C_pad), lambda i: (i, 0)),
        compiler_params=pltpu.CompilerParams(
            dimension_semantics=("parallel",),
            vmem_limit_bytes=64 * 1024 * 1024),
    )(xb, w1.astype(jnp.bfloat16), b1.astype(jnp.float32), w2p, b2p)

    return out[:B, :C]


def init_params(key, input_dim=768, hidden_dim=256, num_classes=3):
    """Deterministic init mirroring nn.Linear's U(-1/sqrt(fan_in), 1/sqrt(fan_in)).
    Weights are stored transposed relative to PyTorch ([in, out]) and in bf16;
    biases stay in f32."""
    k1, k2, k3, k4 = jax.random.split(key, 4)
    bound1 = 1.0 / jnp.sqrt(input_dim)
    bound2 = 1.0 / jnp.sqrt(hidden_dim)
    w1 = jax.random.uniform(k1, (input_dim, hidden_dim), jnp.float32,
                            minval=-bound1, maxval=bound1).astype(jnp.bfloat16)
    b1 = jax.random.uniform(k2, (1, hidden_dim), jnp.float32,
                            minval=-bound1, maxval=bound1)
    w2 = jax.random.uniform(k3, (hidden_dim, num_classes), jnp.float32,
                            minval=-bound2, maxval=bound2).astype(jnp.bfloat16)
    b2 = jax.random.uniform(k4, (1, num_classes), jnp.float32,
                            minval=-bound2, maxval=bound2)
    return w1, b1, w2, b2


if __name__ == "__main__":
    key = jax.random.PRNGKey(0)
    kx, kp = jax.random.split(key)

    B, D, H, C = 8, 768, 256, 3
    x = jax.random.normal(kx, (B, D), dtype=jnp.float32)
    w1, b1, w2, b2 = init_params(kp, D, H, C)

    out = mlp_text_forward(x, w1, b1, w2, b2)
    out = jax.block_until_ready(out)
    assert out.shape == (B, C)

    # Pure-JAX reference mirroring the same bf16-input / f32-accumulate math.
    xb = x.astype(jnp.bfloat16)
    h_ref = jnp.dot(xb, w1, preferred_element_type=jnp.float32) + b1
    h_ref = jnp.maximum(h_ref, 0.0)
    ref = jnp.dot(h_ref.astype(jnp.bfloat16), w2,
                  preferred_element_type=jnp.float32) + b2
    assert jnp.allclose(out, ref, atol=1e-3, rtol=1e-3), (
        f"max abs err {jnp.max(jnp.abs(out - ref))}")

    # Loose sanity check against a full-f32 forward (bf16 quantization error only).
    ref_f32 = jnp.maximum(x @ w1.astype(jnp.float32) + b1, 0.0) \
        @ w2.astype(jnp.float32) + b2
    assert jnp.allclose(out, ref_f32, atol=5e-2, rtol=5e-2)

    print("KERNEL_OK")
</pallas_src>

<mosaic_0001>
module attributes {stable_mosaic.version = 11 : i64} {
  func.func @mlp_text_kernel(%arg0: i32, %arg1: memref<8x768xbf16, #tpu.memory_space<vmem>>, %arg2: memref<768x256xbf16, #tpu.memory_space<vmem>>, %arg3: memref<1x256xf32, #tpu.memory_space<vmem>>, %arg4: memref<256x128xbf16, #tpu.memory_space<vmem>>, %arg5: memref<1x128xf32, #tpu.memory_space<vmem>>, %arg6: memref<8x128xf32, #tpu.memory_space<vmem>>) attributes {dimension_semantics = [#tpu.dimension_semantics<parallel>], iteration_bounds = array<i64: 1>, scalar_prefetch = 0 : i64, scratch_operands = 0 : i64, tpu.core_type = #tpu.core_type<tc>, window_params = [{transform_indices = @transform_0, window_bounds = array<i64: 8, 768>}, {pipeline_mode = #tpu.pipeline_mode<synchronous>, transform_indices = @transform_1, window_bounds = array<i64: 768, 256>}, {pipeline_mode = #tpu.pipeline_mode<synchronous>, transform_indices = @transform_2, window_bounds = array<i64: 1, 256>}, {pipeline_mode = #tpu.pipeline_mode<synchronous>, transform_indices = @transform_3, window_bounds = array<i64: 256, 128>}, {pipeline_mode = #tpu.pipeline_mode<synchronous>, transform_indices = @transform_4, window_bounds = array<i64: 1, 128>}, {transform_indices = @transform_5, window_bounds = array<i64: 8, 128>}]} {
    %c0 = arith.constant 0 : index
    %c0_0 = arith.constant 0 : index
    %0 = vector.load %arg1[%c0, %c0_0] : memref<8x768xbf16, #tpu.memory_space<vmem>>, vector<8x768xbf16>
    %c0_1 = arith.constant 0 : index
    %c0_2 = arith.constant 0 : index
    %1 = vector.load %arg2[%c0_1, %c0_2] : memref<768x256xbf16, #tpu.memory_space<vmem>>, vector<768x256xbf16>
    %cst = arith.constant dense<0.000000e+00> : vector<8x256xf32>
    %2 = tpu.matmul %0, %1, %cst {dimension_numbers = #tpu.dot_dimension_numbers<[1], [0], [0], [1], [0, 0, 1, 1], [], []>} : vector<8x768xbf16>, vector<768x256xbf16>, vector<8x256xf32> -> vector<8x256xf32>
    %c0_3 = arith.constant 0 : index
    %c0_4 = arith.constant 0 : index
    %3 = vector.load %arg3[%c0_3, %c0_4] : memref<1x256xf32, #tpu.memory_space<vmem>>, vector<1x256xf32>
    %4 = vector.broadcast %3 : vector<1x256xf32> to vector<8x256xf32>
    %5 = arith.addf %2, %4 : vector<8x256xf32>
    %cst_5 = arith.constant 0.000000e+00 : f32
    %6 = vector.broadcast %cst_5 : f32 to vector<8x256xf32>
    %7 = arith.maximumf %5, %6 : vector<8x256xf32>
    %8 = arith.truncf %7 : vector<8x256xf32> to vector<8x256xbf16>
    %c0_6 = arith.constant 0 : index
    %c0_7 = arith.constant 0 : index
    %9 = vector.load %arg4[%c0_6, %c0_7] : memref<256x128xbf16, #tpu.memory_space<vmem>>, vector<256x128xbf16>
    %cst_8 = arith.constant dense<0.000000e+00> : vector<8x128xf32>
    %10 = tpu.matmul %8, %9, %cst_8 {dimension_numbers = #tpu.dot_dimension_numbers<[1], [0], [0], [1], [0, 0, 1, 1], [], []>} : vector<8x256xbf16>, vector<256x128xbf16>, vector<8x128xf32> -> vector<8x128xf32>
    %c0_9 = arith.constant 0 : index
    %c0_10 = arith.constant 0 : index
    %11 = vector.load %arg5[%c0_9, %c0_10] : memref<1x128xf32, #tpu.memory_space<vmem>>, vector<1x128xf32>
    %12 = vector.broadcast %11 : vector<1x128xf32> to vector<8x128xf32>
    %13 = arith.addf %10, %12 : vector<8x128xf32>
    %c0_11 = arith.constant 0 : index
    %c0_12 = arith.constant 0 : index
    %14 = vector.load %arg6[%c0_11, %c0_12] : memref<8x128xf32, #tpu.memory_space<vmem>>, vector<8x128xf32>
    tpu.vector_store %arg6[%c0_11, %c0_12], %13 {strides = array<i32>} : memref<8x128xf32, #tpu.memory_space<vmem>>, vector<8x128xf32>,
    return
  }
  func.func @transform_0(%arg0: i32) -> (i32, i32) {
    %c0_i32 = arith.constant 0 : i32
    %c0_i32_0 = arith.constant 0 : i32
    return %arg0, %c0_i32 : i32, i32
  }
  func.func @transform_1(%arg0: i32) -> (i32, i32) {
    %c0_i32 = arith.constant 0 : i32
    %c0_i32_0 = arith.constant 0 : i32
    %c0_i32_1 = arith.constant 0 : i32
    return %c0_i32, %c0_i32_0 : i32, i32
  }
  func.func @transform_2(%arg0: i32) -> (i32, i32) {
    %c0_i32 = arith.constant 0 : i32
    %c0_i32_0 = arith.constant 0 : i32
    %c0_i32_1 = arith.constant 0 : i32
    return %c0_i32, %c0_i32_0 : i32, i32
  }
  func.func @transform_3(%arg0: i32) -> (i32, i32) {
    %c0_i32 = arith.constant 0 : i32
    %c0_i32_0 = arith.constant 0 : i32
    %c0_i32_1 = arith.constant 0 : i32
    return %c0_i32, %c0_i32_0 : i32, i32
  }
  func.func @transform_4(%arg0: i32) -> (i32, i32) {
    %c0_i32 = arith.constant 0 : i32
    %c0_i32_0 = arith.constant 0 : i32
    %c0_i32_1 = arith.constant 0 : i32
    return %c0_i32, %c0_i32_0 : i32, i32
  }
  func.func @transform_5(%arg0: i32) -> (i32, i32) {
    %c0_i32 = arith.constant 0 : i32
    %c0_i32_0 = arith.constant 0 : i32
    return %arg0, %c0_i32 : i32, i32
  }
}

</mosaic_0001>

<llo_original>
// kernel: tpu_custom_call.1
$region0: #{tpu_custom_call.1}
  #allocation0 [shape = 'u32[]', space=smem, size = 0x4, offset = 0x4, fixed_abs, tag = 'smem constant byte address 0x4 - core index']
  #allocation1 [shape = 'u32[144,128]{1,0:T(1,128)}', space=vmem, size = 0x12000, scoped, tag = 'internal scratch']
  %s0 = inlined_call_operand.hbm [shape: bf16[8,768], index: 0, kind: input, shape index: {}]
  %s1 = inlined_call_operand.hbm [shape: bf16[768,256], index: 1, kind: input, shape index: {}]
  %s2 = inlined_call_operand.hbm [shape: f32[1,256], index: 2, kind: input, shape index: {}]
  %s3 = inlined_call_operand.hbm [shape: bf16[256,128], index: 3, kind: input, shape index: {}]
  %s4 = inlined_call_operand.hbm [shape: f32[1,128], index: 4, kind: input, shape index: {}]
  %s5 = inlined_call_operand.hbm [shape: f32[8,128], index: 5, kind: output, shape index: {}]
  %s6 = sld [smem:[#allocation0]]
  $region50: #{tpu_custom_call.1} parent=0
    _
  %s8 = ssub.s32 1, %s6
  %s9 = scalar_select 0, %s8, %s6
  $region1: #{tpu_custom_call.1} parent=0
    #allocation2 [shape = 'u8[12288]{0}', space=vmem, size = 0x3000, scoped, tag = 'input window, operand 0, single buffered']
    #allocation3 [shape = 's32[1]{0}', space=sflag, size = 0x4, scoped, tag = 'scoped memory for tpu_custom_call.1']
    #allocation4 [shape = 's32[1]{0}', space=sflag, size = 0x4, scoped, tag = 'scoped memory for tpu_custom_call.1']
    #allocation5 [shape = 'u8[393216]{0}', space=vmem, size = 0x60000, scoped, tag = 'input window, operand 1, single buffered']
    #allocation6 [shape = 's32[1]{0}', space=sflag, size = 0x4, scoped, tag = 'scoped memory for tpu_custom_call.1']
    #allocation7 [shape = 'u8[1024]{0}', space=vmem, size = 0x400, scoped, tag = 'input window, operand 2, single buffered']
    #allocation8 [shape = 'u8[65536]{0}', space=vmem, size = 0x10000, scoped, tag = 'input window, operand 3, single buffered']
    #allocation9 [shape = 's32[1]{0}', space=sflag, size = 0x4, scoped, tag = 'scoped memory for tpu_custom_call.1']
    #allocation10 [shape = 'u8[512]{0}', space=vmem, size = 0x400, scoped, tag = 'input window, operand 4, single buffered']
    #allocation11 [shape = 'u8[4096]{0}', space=vmem, size = 0x1000, scoped, tag = 'output window, operand 0, single buffered']
    %10 = vsyncpa [#allocation3], 0
    %11 = vsyncpa [#allocation6], 0
    %12 = vsyncpa [#allocation9], 0
    %13 = vsyncpa [#allocation4], 0
    // Predicated region
    $region2: #{tpu_custom_call.1} parent=1 // pred_check
      _
    $region3: #{tpu_custom_call.1} parent=1 // pred_check_branch
      %15 = sbr.rel (0) target = $region5
    $region4: #{tpu_custom_call.1} parent=1 // pred_region
      %s17 = ssub.s32 384, 384
      %18 = vsyncadd [#allocation3], %s17
      %s20 = sshll.u32 [#allocation2], 4
      %s21 = int_to_ptr.vmem [resolvable:$true] %s20
      %23 = dma.hbm_to_vmem [thread:$0]  %s0, 384, %s21, [#allocation3]
    $region5: #{tpu_custom_call.1} parent=1 // pred_fallthru
      _
    // Predicated region
    $region6: #{tpu_custom_call.1} parent=1 // pred_check
      _
    $region7: #{tpu_custom_call.1} parent=1 // pred_check_branch
      %25 = sbr.rel (0) target = $region9
    $region8: #{tpu_custom_call.1} parent=1 // pred_region
      %s27 = ssub.s32 12288, 12288
      %28 = vsyncadd [#allocation6], %s27
      %s29 = sshll.u32 [#allocation5], 4
      %s30 = int_to_ptr.vmem [resolvable:$true] %s29
      %35 = dma.hbm_to_vmem [thread:$0]  %s1, 12288, %s30, [#allocation6], 128, 128, 8
    $region9: #{tpu_custom_call.1} parent=1 // pred_fallthru
      _
    // Predicated region
    $region10: #{tpu_custom_call.1} parent=1 // pred_check
      _
    $region11: #{tpu_custom_call.1} parent=1 // pred_check_branch
      %37 = sbr.rel (0) target = $region13
    $region12: #{tpu_custom_call.1} parent=1 // pred_region
      %s39 = ssub.s32 32, 32
      %40 = vsyncadd [#allocation6], %s39
      %s42 = sshll.u32 [#allocation7], 4
      %s43 = int_to_ptr.vmem [resolvable:$true] %s42
      %45 = dma.hbm_to_vmem [thread:$0]  %s2, 32, %s43, [#allocation6]
    $region13: #{tpu_custom_call.1} parent=1 // pred_fallthru
      _
    // Predicated region
    $region14: #{tpu_custom_call.1} parent=1 // pred_check
      _
    $region15: #{tpu_custom_call.1} parent=1 // pred_check_branch
      %47 = sbr.rel (0) target = $region17
    $region16: #{tpu_custom_call.1} parent=1 // pred_region
      %s49 = ssub.s32 2048, 2048
      %50 = vsyncadd [#allocation9], %s49
      %s51 = sshll.u32 [#allocation8], 4
      %s52 = int_to_ptr.vmem [resolvable:$true] %s51
      %57 = dma.hbm_to_vmem [thread:$0]  %s3, 2048, %s52, [#allocation9], 64, 64, 4
    $region17: #{tpu_custom_call.1} parent=1 // pred_fallthru
      _
    // Predicated region
    $region18: #{tpu_custom_call.1} parent=1 // pred_check
      _
    $region19: #{tpu_custom_call.1} parent=1 // pred_check_branch
      %59 = sbr.rel (0) target = $region21
    $region20: #{tpu_custom_call.1} parent=1 // pred_region
      %s61 = ssub.s32 16, 16
      %62 = vsyncadd [#allocation9], %s61
      %s64 = sshll.u32 [#allocation10], 4
      %s65 = int_to_ptr.vmem [resolvable:$true] %s64
      %67 = dma.hbm_to_vmem [thread:$0]  %s4, 16, %s65, [#allocation9]
    $region21: #{tpu_custom_call.1} parent=1 // pred_fallthru
      _
    // Predicated region
    $region22: #{tpu_custom_call.1} parent=1 // pred_check
      _
    $region23: #{tpu_custom_call.1} parent=1 // pred_check_branch
      %69 = sbr.rel (0) target = $region25
    $region24: #{tpu_custom_call.1} parent=1 // pred_region
      %70 = dma.done [#allocation3], 384
    $region25: #{tpu_custom_call.1} parent=1 // pred_fallthru
      _
    // Predicated region
    $region26: #{tpu_custom_call.1} parent=1 // pred_check
      _
    $region27: #{tpu_custom_call.1} parent=1 // pred_check_branch
      %72 = sbr.rel (0) target = $region29
    $region28: #{tpu_custom_call.1} parent=1 // pred_region
      %73 = dma.done [#allocation6], 12288
    $region29: #{tpu_custom_call.1} parent=1 // pred_fallthru
      _
    // Predicated region
    $region30: #{tpu_custom_call.1} parent=1 // pred_check
      _
    $region31: #{tpu_custom_call.1} parent=1 // pred_check_branch
      %75 = sbr.rel (0) target = $region33
    $region32: #{tpu_custom_call.1} parent=1 // pred_region
      %76 = dma.done [#allocation6], 32
    $region33: #{tpu_custom_call.1} parent=1 // pred_fallthru
      _
    // Predicated region
    $region34: #{tpu_custom_call.1} parent=1 // pred_check
      _
    $region35: #{tpu_custom_call.1} parent=1 // pred_check_branch
      %78 = sbr.rel (0) target = $region37
    $region36: #{tpu_custom_call.1} parent=1 // pred_region
      %79 = dma.done [#allocation9], 2048
    $region37: #{tpu_custom_call.1} parent=1 // pred_fallthru
      _
    // Predicated region
    $region38: #{tpu_custom_call.1} parent=1 // pred_check
      _
    $region39: #{tpu_custom_call.1} parent=1 // pred_check_branch
      %81 = sbr.rel (0) target = $region41
    $region40: #{tpu_custom_call.1} parent=1 // pred_region
      %82 = dma.done [#allocation9], 16
    $region41: #{tpu_custom_call.1} parent=1 // pred_fallthru
      _
    %v84 = vld [vmem:[#allocation2] sm:$0xff]
    %v85 = vld [vmem:[#allocation2 + $0x8] sm:$0xff]
    %v86 = vld [vmem:[#allocation2 + $0x10] sm:$0xff]
    %v87 = vld [vmem:[#allocation5] sm:$0xff]
    %v88 = vld [vmem:[#allocation5 + $0x8] sm:$0xff]
    %v89 = vld [vmem:[#allocation5 + $0x10] sm:$0xff]
    %v90 = vld [vmem:[#allocation5 + $0x18] sm:$0xff]
    %v91 = vld [vmem:[#allocation5 + $0x20] sm:$0xff]
    %v92 = vld [vmem:[#allocation5 + $0x28] sm:$0xff]
    %v93 = vld [vmem:[#allocation5 + $0x30] sm:$0xff]
    %v94 = vld [vmem:[#allocation5 + $0x38] sm:$0xff]
    %v95 = vld [vmem:[#allocation5 + $0x40] sm:$0xff]
    %v96 = vld [vmem:[#allocation5 + $0x48] sm:$0xff]
    %v97 = vld [vmem:[#allocation5 + $0x50] sm:$0xff]
    %v98 = vld [vmem:[#allocation5 + $0x58] sm:$0xff]
    %v99 = vld [vmem:[#allocation5 + $0x60] sm:$0xff]
    %v100 = vld [vmem:[#allocation5 + $0x68] sm:$0xff]
    %v101 = vld [vmem:[#allocation5 + $0x70] sm:$0xff]
    %v102 = vld [vmem:[#allocation5 + $0x78] sm:$0xff]
    %v103 = vld [vmem:[#allocation5 + $0x80] sm:$0xff]
    %v104 = vld [vmem:[#allocation5 + $0x88] sm:$0xff]
    %v105 = vld [vmem:[#allocation5 + $0x90] sm:$0xff]
    %v106 = vld [vmem:[#allocation5 + $0x98] sm:$0xff]
    %v107 = vld [vmem:[#allocation5 + $0xa0] sm:$0xff]
    %v108 = vld [vmem:[#allocation5 + $0xa8] sm:$0xff]
    %v109 = vld [vmem:[#allocation5 + $0xb0] sm:$0xff]
    %v110 = vld [vmem:[#allocation5 + $0xb8] sm:$0xff]
    %v111 = vld [vmem:[#allocation5 + $0xc0] sm:$0xff]
    %v112 = vld [vmem:[#allocation5 + $0xc8] sm:$0xff]
    %v113 = vld [vmem:[#allocation5 + $0xd0] sm:$0xff]
    %v114 = vld [vmem:[#allocation5 + $0xd8] sm:$0xff]
    %v115 = vld [vmem:[#allocation5 + $0xe0] sm:$0xff]
    %v116 = vld [vmem:[#allocation5 + $0xe8] sm:$0xff]
    %v117 = vld [vmem:[#allocation5 + $0xf0] sm:$0xff]
    %v118 = vld [vmem:[#allocation5 + $0xf8] sm:$0xff]
    %v119 = vld [vmem:[#allocation5 + $0x100] sm:$0xff]
    %v120 = vld [vmem:[#allocation5 + $0x108] sm:$0xff]
    %v121 = vld [vmem:[#allocation5 + $0x110] sm:$0xff]
    %v122 = vld [vmem:[#allocation5 + $0x118] sm:$0xff]
    %v123 = vld [vmem:[#allocation5 + $0x120] sm:$0xff]
    %v124 = vld [vmem:[#allocation5 + $0x128] sm:$0xff]
    %v125 = vld [vmem:[#allocation5 + $0x130] sm:$0xff]
    %v126 = vld [vmem:[#allocation5 + $0x138] sm:$0xff]
    %v127 = vld [vmem:[#allocation5 + $0x140] sm:$0xff]
    %v128 = vld [vmem:[#allocation5 + $0x148] sm:$0xff]
    %v129 = vld [vmem:[#allocation5 + $0x150] sm:$0xff]
    %v130 = vld [vmem:[#allocation5 + $0x158] sm:$0xff]
    %v131 = vld [vmem:[#allocation5 + $0x160] sm:$0xff]
    %v132 = vld [vmem:[#allocation5 + $0x168] sm:$0xff]
    %v133 = vld [vmem:[#allocation5 + $0x170] sm:$0xff]
    %v134 = vld [vmem:[#allocation5 + $0x178] sm:$0xff]
    %v135 = vld [vmem:[#allocation5 + $0x180] sm:$0xff]
    %v136 = vld [vmem:[#allocation5 + $0x188] sm:$0xff]
    %v137 = vld [vmem:[#allocation5 + $0x190] sm:$0xff]
    %v138 = vld [vmem:[#allocation5 + $0x198] sm:$0xff]
    %v139 = vld [vmem:[#allocation5 + $0x1a0] sm:$0xff]
    %v140 = vld [vmem:[#allocation5 + $0x1a8] sm:$0xff]
    %v141 = vld [vmem:[#allocation5 + $0x1b0] sm:$0xff]
    %v142 = vld [vmem:[#allocation5 + $0x1b8] sm:$0xff]
    %v143 = vld [vmem:[#allocation5 + $0x1c0] sm:$0xff]
    %v144 = vld [vmem:[#allocation5 + $0x1c8] sm:$0xff]
    %v145 = vld [vmem:[#allocation5 + $0x1d0] sm:$0xff]
    %v146 = vld [vmem:[#allocation5 + $0x1d8] sm:$0xff]
    %v147 = vld [vmem:[#allocation5 + $0x1e0] sm:$0xff]
    %v148 = vld [vmem:[#allocation5 + $0x1e8] sm:$0xff]
    %v149 = vld [vmem:[#allocation5 + $0x1f0] sm:$0xff]
    %v150 = vld [vmem:[#allocation5 + $0x1f8] sm:$0xff]
    %v151 = vld [vmem:[#allocation5 + $0x200] sm:$0xff]
    %v152 = vld [vmem:[#allocation5 + $0x208] sm:$0xff]
    %v153 = vld [vmem:[#allocation5 + $0x210] sm:$0xff]
    %v154 = vld [vmem:[#allocation5 + $0x218] sm:$0xff]
    %v155 = vld [vmem:[#allocation5 + $0x220] sm:$0xff]
    %v156 = vld [vmem:[#allocation5 + $0x228] sm:$0xff]
    %v157 = vld [vmem:[#allocation5 + $0x230] sm:$0xff]
    %v158 = vld [vmem:[#allocation5 + $0x238] sm:$0xff]
    %v159 = vld [vmem:[#allocation5 + $0x240] sm:$0xff]
    %v160 = vld [vmem:[#allocation5 + $0x248] sm:$0xff]
    %v161 = vld [vmem:[#allocation5 + $0x250] sm:$0xff]
    %v162 = vld [vmem:[#allocation5 + $0x258] sm:$0xff]
    %v163 = vld [vmem:[#allocation5 + $0x260] sm:$0xff]
    %v164 = vld [vmem:[#allocation5 + $0x268] sm:$0xff]
    %v165 = vld [vmem:[#allocation5 + $0x270] sm:$0xff]
    %v166 = vld [vmem:[#allocation5 + $0x278] sm:$0xff]
    %v167 = vld [vmem:[#allocation5 + $0x280] sm:$0xff]
    %v168 = vld [vmem:[#allocation5 + $0x288] sm:$0xff]
    %v169 = vld [vmem:[#allocation5 + $0x290] sm:$0xff]
    %v170 = vld [vmem:[#allocation5 + $0x298] sm:$0xff]
    %v171 = vld [vmem:[#allocation5 + $0x2a0] sm:$0xff]
    %v172 = vld [vmem:[#allocation5 + $0x2a8] sm:$0xff]
    %v173 = vld [vmem:[#allocation5 + $0x2b0] sm:$0xff]
    %v174 = vld [vmem:[#allocation5 + $0x2b8] sm:$0xff]
    %v175 = vld [vmem:[#allocation5 + $0x2c0] sm:$0xff]
    %v176 = vld [vmem:[#allocation5 + $0x2c8] sm:$0xff]
    %v177 = vld [vmem:[#allocation5 + $0x2d0] sm:$0xff]
    %v178 = vld [vmem:[#allocation5 + $0x2d8] sm:$0xff]
    %v179 = vld [vmem:[#allocation5 + $0x2e0] sm:$0xff]
    %v180 = vld [vmem:[#allocation5 + $0x2e8] sm:$0xff]
    %v181 = vld [vmem:[#allocation5 + $0x2f0] sm:$0xff]
    %v182 = vld [vmem:[#allocation5 + $0x2f8] sm:$0xff]
    %v183 = vld [vmem:[#allocation7] sm:$0x3]
    %v185 = vlaneseq
    %v186 = vshrl.u32 %v185, 7
    %v187 = vsub.s32 0, %v186
    %v188 = vrot.slane %v183, %v187
    %v189 = vlaneseq
    %v190 = vshrl.u32 %v189, 7
    %v191 = vsub.s32 1, %v190
    %v192 = vrot.slane %v183, %v191
    %v198 = vunpack.c.l.b16 %v84
    %v199 = vunpack.c.h.b16 %v84
    %v200 = vunpack.c.l.b16 %v85
    %v201 = vunpack.c.h.b16 %v85
    %v202 = vunpack.c.l.b16 %v86
    %v203 = vunpack.c.h.b16 %v86
    %v204 = vpack.c.b16 %v198, %v198
    %v205 = vpack.c.b16 %v199, %v199
    %v206 = vpack.c.b16 %v200, %v200
    %v207 = vpack.c.b16 %v201, %v201
    %v208 = vpack.c.b16 %v202, %v202
    %v209 = vpack.c.b16 %v203, %v203
    %v312 = vunpack.c.l.b16 %v87
    %v313 = vunpack.c.h.b16 %v87
    %v314 = vunpack.c.l.b16 %v88
    %v315 = vunpack.c.h.b16 %v88
    %v316 = vunpack.c.l.b16 %v89
    %v317 = vunpack.c.h.b16 %v89
    %v318 = vunpack.c.l.b16 %v90
    %v319 = vunpack.c.h.b16 %v90
    %v320 = vunpack.c.l.b16 %v91
    %v321 = vunpack.c.h.b16 %v91
    %v322 = vunpack.c.l.b16 %v92
    %v323 = vunpack.c.h.b16 %v92
    %v324 = vunpack.c.l.b16 %v93
    %v325 = vunpack.c.h.b16 %v93
    %v326 = vunpack.c.l.b16 %v94
    %v327 = vunpack.c.h.b16 %v94
    %v328 = vunpack.c.l.b16 %v95
    %v329 = vunpack.c.h.b16 %v95
    %v330 = vunpack.c.l.b16 %v96
    %v331 = vunpack.c.h.b16 %v96
    %v332 = vunpack.c.l.b16 %v97
    %v333 = vunpack.c.h.b16 %v97
    %v334 = vunpack.c.l.b16 %v98
    %v335 = vunpack.c.h.b16 %v98
    %v336 = vunpack.c.l.b16 %v99
    %v337 = vunpack.c.h.b16 %v99
    %v338 = vunpack.c.l.b16 %v100
    %v339 = vunpack.c.h.b16 %v100
    %v340 = vunpack.c.l.b16 %v101
    %v341 = vunpack.c.h.b16 %v101
    %v342 = vunpack.c.l.b16 %v102
    %v343 = vunpack.c.h.b16 %v102
    %v344 = vunpack.c.l.b16 %v103
    %v345 = vunpack.c.h.b16 %v103
    %v346 = vunpack.c.l.b16 %v104
    %v347 = vunpack.c.h.b16 %v104
    %v348 = vunpack.c.l.b16 %v105
    %v349 = vunpack.c.h.b16 %v105
    %v350 = vunpack.c.l.b16 %v106
    %v351 = vunpack.c.h.b16 %v106
    %v352 = vunpack.c.l.b16 %v107
    %v353 = vunpack.c.h.b16 %v107
    %v354 = vunpack.c.l.b16 %v108
    %v355 = vunpack.c.h.b16 %v108
    %v356 = vunpack.c.l.b16 %v109
    %v357 = vunpack.c.h.b16 %v109
    %v358 = vunpack.c.l.b16 %v110
    %v359 = vunpack.c.h.b16 %v110
    %v360 = vunpack.c.l.b16 %v111
    %v361 = vunpack.c.h.b16 %v111
    %v362 = vunpack.c.l.b16 %v112
    %v363 = vunpack.c.h.b16 %v112
    %v364 = vunpack.c.l.b16 %v113
    %v365 = vunpack.c.h.b16 %v113
    %v366 = vunpack.c.l.b16 %v114
    %v367 = vunpack.c.h.b16 %v114
    %v368 = vunpack.c.l.b16 %v115
    %v369 = vunpack.c.h.b16 %v115
    %v370 = vunpack.c.l.b16 %v116
    %v371 = vunpack.c.h.b16 %v116
    %v372 = vunpack.c.l.b16 %v117
    %v373 = vunpack.c.h.b16 %v117
    %v374 = vunpack.c.l.b16 %v118
    %v375 = vunpack.c.h.b16 %v118
    %v376 = vunpack.c.l.b16 %v119
    %v377 = vunpack.c.h.b16 %v119
    %v378 = vunpack.c.l.b16 %v120
    %v379 = vunpack.c.h.b16 %v120
    %v380 = vunpack.c.l.b16 %v121
    %v381 = vunpack.c.h.b16 %v121
    %v382 = vunpack.c.l.b16 %v122
    %v383 = vunpack.c.h.b16 %v122
    %v384 = vunpack.c.l.b16 %v123
    %v385 = vunpack.c.h.b16 %v123
    %v386 = vunpack.c.l.b16 %v124
    %v387 = vunpack.c.h.b16 %v124
    %v388 = vunpack.c.l.b16 %v125
    %v389 = vunpack.c.h.b16 %v125
    %v390 = vunpack.c.l.b16 %v126
    %v391 = vunpack.c.h.b16 %v126
    %v392 = vunpack.c.l.b16 %v127
    %v393 = vunpack.c.h.b16 %v127
    %v394 = vunpack.c.l.b16 %v128
    %v395 = vunpack.c.h.b16 %v128
    %v396 = vunpack.c.l.b16 %v129
    %v397 = vunpack.c.h.b16 %v129
    %v398 = vunpack.c.l.b16 %v130
    %v399 = vunpack.c.h.b16 %v130
    %v400 = vunpack.c.l.b16 %v131
    %v401 = vunpack.c.h.b16 %v131
    %v402 = vunpack.c.l.b16 %v132
    %v403 = vunpack.c.h.b16 %v132
    %v404 = vunpack.c.l.b16 %v133
    %v405 = vunpack.c.h.b16 %v133
    %v406 = vunpack.c.l.b16 %v134
    %v407 = vunpack.c.h.b16 %v134
    %v408 = vunpack.c.l.b16 %v135
    %v409 = vunpack.c.h.b16 %v135
    %v410 = vunpack.c.l.b16 %v136
    %v411 = vunpack.c.h.b16 %v136
    %v412 = vunpack.c.l.b16 %v137
    %v413 = vunpack.c.h.b16 %v137
    %v414 = vunpack.c.l.b16 %v138
    %v415 = vunpack.c.h.b16 %v138
    %v416 = vunpack.c.l.b16 %v139
    %v417 = vunpack.c.h.b16 %v139
    %v418 = vunpack.c.l.b16 %v140
    %v419 = vunpack.c.h.b16 %v140
    %v420 = vunpack.c.l.b16 %v141
    %v421 = vunpack.c.h.b16 %v141
    %v422 = vunpack.c.l.b16 %v142
    %v423 = vunpack.c.h.b16 %v142
    %v424 = vunpack.c.l.b16 %v143
    %v425 = vunpack.c.h.b16 %v143
    %v426 = vunpack.c.l.b16 %v144
    %v427 = vunpack.c.h.b16 %v144
    %v428 = vunpack.c.l.b16 %v145
    %v429 = vunpack.c.h.b16 %v145
    %v430 = vunpack.c.l.b16 %v146
    %v431 = vunpack.c.h.b16 %v146
    %v432 = vunpack.c.l.b16 %v147
    %v433 = vunpack.c.h.b16 %v147
    %v434 = vunpack.c.l.b16 %v148
    %v435 = vunpack.c.h.b16 %v148
    %v436 = vunpack.c.l.b16 %v149
    %v437 = vunpack.c.h.b16 %v149
    %v438 = vunpack.c.l.b16 %v150
    %v439 = vunpack.c.h.b16 %v150
    %v440 = vunpack.c.l.b16 %v151
    %v441 = vunpack.c.h.b16 %v151
    %v442 = vunpack.c.l.b16 %v152
    %v443 = vunpack.c.h.b16 %v152
    %v444 = vunpack.c.l.b16 %v153
    %v445 = vunpack.c.h.b16 %v153
    %v446 = vunpack.c.l.b16 %v154
    %v447 = vunpack.c.h.b16 %v154
    %v448 = vunpack.c.l.b16 %v155
    %v449 = vunpack.c.h.b16 %v155
    %v450 = vunpack.c.l.b16 %v156
    %v451 = vunpack.c.h.b16 %v156
    %v452 = vunpack.c.l.b16 %v157
    %v453 = vunpack.c.h.b16 %v157
    %v454 = vunpack.c.l.b16 %v158
    %v455 = vunpack.c.h.b16 %v158
    %v456 = vunpack.c.l.b16 %v159
    %v457 = vunpack.c.h.b16 %v159
    %v458 = vunpack.c.l.b16 %v160
    %v459 = vunpack.c.h.b16 %v160
    %v460 = vunpack.c.l.b16 %v161
    %v461 = vunpack.c.h.b16 %v161
    %v462 = vunpack.c.l.b16 %v162
    %v463 = vunpack.c.h.b16 %v162
    %v464 = vunpack.c.l.b16 %v163
    %v465 = vunpack.c.h.b16 %v163
    %v466 = vunpack.c.l.b16 %v164
    %v467 = vunpack.c.h.b16 %v164
    %v468 = vunpack.c.l.b16 %v165
    %v469 = vunpack.c.h.b16 %v165
    %v470 = vunpack.c.l.b16 %v166
    %v471 = vunpack.c.h.b16 %v166
    %v472 = vunpack.c.l.b16 %v167
    %v473 = vunpack.c.h.b16 %v167
    %v474 = vunpack.c.l.b16 %v168
    %v475 = vunpack.c.h.b16 %v168
    %v476 = vunpack.c.l.b16 %v169
    %v477 = vunpack.c.h.b16 %v169
    %v478 = vunpack.c.l.b16 %v170
    %v479 = vunpack.c.h.b16 %v170
    %v480 = vunpack.c.l.b16 %v171
    %v481 = vunpack.c.h.b16 %v171
    %v482 = vunpack.c.l.b16 %v172
    %v483 = vunpack.c.h.b16 %v172
    %v484 = vunpack.c.l.b16 %v173
    %v485 = vunpack.c.h.b16 %v173
    %v486 = vunpack.c.l.b16 %v174
    %v487 = vunpack.c.h.b16 %v174
    %v488 = vunpack.c.l.b16 %v175
    %v489 = vunpack.c.h.b16 %v175
    %v490 = vunpack.c.l.b16 %v176
    %v491 = vunpack.c.h.b16 %v176
    %v492 = vunpack.c.l.b16 %v177
    %v493 = vunpack.c.h.b16 %v177
    %v494 = vunpack.c.l.b16 %v178
    %v495 = vunpack.c.h.b16 %v178
    %v496 = vunpack.c.l.b16 %v179
    %v497 = vunpack.c.h.b16 %v179
    %v498 = vunpack.c.l.b16 %v180
    %v499 = vunpack.c.h.b16 %v180
    %v500 = vunpack.c.l.b16 %v181
    %v501 = vunpack.c.h.b16 %v181
    %v502 = vunpack.c.l.b16 %v182
    %v503 = vunpack.c.h.b16 %v182
    %v504 = vpack.c.b16 %v314, %v312
    %v505 = vpack.c.b16 %v315, %v313
    %v506 = vpack.c.b16 %v318, %v316
    %v507 = vpack.c.b16 %v319, %v317
    %v508 = vpack.c.b16 %v322, %v320
    %v509 = vpack.c.b16 %v323, %v321
    %v510 = vpack.c.b16 %v326, %v324
    %v511 = vpack.c.b16 %v327, %v325
    %v512 = vpack.c.b16 %v330, %v328
    %v513 = vpack.c.b16 %v331, %v329
    %v514 = vpack.c.b16 %v334, %v332
    %v515 = vpack.c.b16 %v335, %v333
    %v516 = vpack.c.b16 %v338, %v336
    %v517 = vpack.c.b16 %v339, %v337
    %v518 = vpack.c.b16 %v342, %v340
    %v519 = vpack.c.b16 %v343, %v341
    %v520 = vpack.c.b16 %v346, %v344
    %v521 = vpack.c.b16 %v347, %v345
    %v522 = vpack.c.b16 %v350, %v348
    %v523 = vpack.c.b16 %v351, %v349
    %v524 = vpack.c.b16 %v354, %v352
    %v525 = vpack.c.b16 %v355, %v353
    %v526 = vpack.c.b16 %v358, %v356
    %v527 = vpack.c.b16 %v359, %v357
    %v528 = vpack.c.b16 %v362, %v360
    %v529 = vpack.c.b16 %v363, %v361
    %v530 = vpack.c.b16 %v366, %v364
    %v531 = vpack.c.b16 %v367, %v365
    %v532 = vpack.c.b16 %v370, %v368
    %v533 = vpack.c.b16 %v371, %v369
    %v534 = vpack.c.b16 %v374, %v372
    %v535 = vpack.c.b16 %v375, %v373
    %v536 = vpack.c.b16 %v378, %v376
    %v537 = vpack.c.b16 %v379, %v377
    %v538 = vpack.c.b16 %v382, %v380
    %v539 = vpack.c.b16 %v383, %v381
    %v540 = vpack.c.b16 %v386, %v384
    %v541 = vpack.c.b16 %v387, %v385
    %v542 = vpack.c.b16 %v390, %v388
    %v543 = vpack.c.b16 %v391, %v389
    %v544 = vpack.c.b16 %v394, %v392
    %v545 = vpack.c.b16 %v395, %v393
    %v546 = vpack.c.b16 %v398, %v396
    %v547 = vpack.c.b16 %v399, %v397
    %v548 = vpack.c.b16 %v402, %v400
    %v549 = vpack.c.b16 %v403, %v401
    %v550 = vpack.c.b16 %v406, %v404
    %v551 = vpack.c.b16 %v407, %v405
    %v552 = vpack.c.b16 %v410, %v408
    %v553 = vpack.c.b16 %v411, %v409
    %v554 = vpack.c.b16 %v414, %v412
    %v555 = vpack.c.b16 %v415, %v413
    %v556 = vpack.c.b16 %v418, %v416
    %v557 = vpack.c.b16 %v419, %v417
    %v558 = vpack.c.b16 %v422, %v420
    %v559 = vpack.c.b16 %v423, %v421
    %v560 = vpack.c.b16 %v426, %v424
    %v561 = vpack.c.b16 %v427, %v425
    %v562 = vpack.c.b16 %v430, %v428
    %v563 = vpack.c.b16 %v431, %v429
    %v564 = vpack.c.b16 %v434, %v432
    %v565 = vpack.c.b16 %v435, %v433
    %v566 = vpack.c.b16 %v438, %v436
    %v567 = vpack.c.b16 %v439, %v437
    %v568 = vpack.c.b16 %v442, %v440
    %v569 = vpack.c.b16 %v443, %v441
    %v570 = vpack.c.b16 %v446, %v444
    %v571 = vpack.c.b16 %v447, %v445
    %v572 = vpack.c.b16 %v450, %v448
    %v573 = vpack.c.b16 %v451, %v449
    %v574 = vpack.c.b16 %v454, %v452
    %v575 = vpack.c.b16 %v455, %v453
    %v576 = vpack.c.b16 %v458, %v456
    %v577 = vpack.c.b16 %v459, %v457
    %v578 = vpack.c.b16 %v462, %v460
    %v579 = vpack.c.b16 %v463, %v461
    %v580 = vpack.c.b16 %v466, %v464
    %v581 = vpack.c.b16 %v467, %v465
    %v582 = vpack.c.b16 %v470, %v468
    %v583 = vpack.c.b16 %v471, %v469
    %v584 = vpack.c.b16 %v474, %v472
    %v585 = vpack.c.b16 %v475, %v473
    %v586 = vpack.c.b16 %v478, %v476
    %v587 = vpack.c.b16 %v479, %v477
    %v588 = vpack.c.b16 %v482, %v480
    %v589 = vpack.c.b16 %v483, %v481
    %v590 = vpack.c.b16 %v486, %v484
    %v591 = vpack.c.b16 %v487, %v485
    %v592 = vpack.c.b16 %v490, %v488
    %v593 = vpack.c.b16 %v491, %v489
    %v594 = vpack.c.b16 %v494, %v492
    %v595 = vpack.c.b16 %v495, %v493
    %v596 = vpack.c.b16 %v498, %v496
    %v597 = vpack.c.b16 %v499, %v497
    %v598 = vpack.c.b16 %v502, %v500
    %v599 = vpack.c.b16 %v503, %v501
    %696 = vmatprep.subr.bf16.mxu0 %v505
    %697 = vmatpush1.bf16.msra.mxu0 %v504
    %698 = vmatprep.subr.bf16.mxu0 %v507
    %699 = vmatpush1.bf16.msra.mxu0 %v506
    %700 = vmatprep.subr.bf16.mxu0 %v509
    %701 = vmatpush1.bf16.msra.mxu0 %v508
    %702 = vmatprep.subr.bf16.mxu0 %v511
    %703 = vmatpush1.bf16.msra.mxu0 %v510
    %704 = vmatprep.subr.bf16.mxu0 %v513
    %705 = vmatpush1.bf16.msra.mxu0 %v512
    %706 = vmatprep.subr.bf16.mxu0 %v515
    %707 = vmatpush1.bf16.msra.mxu0 %v514
    %708 = vmatprep.subr.bf16.mxu0 %v517
    %709 = vmatpush1.bf16.msra.mxu0 %v516
    %710 = vmatprep.subr.bf16.mxu0 %v519
    %711 = vmatpush1.bf16.msra.mxu0 %v518
    %712 = vmatprep.subr.bf16.mxu0 %v521
    %713 = vmatpush1.bf16.msra.mxu0 %v520
    %714 = vmatprep.subr.bf16.mxu0 %v523
    %715 = vmatpush1.bf16.msra.mxu0 %v522
    %716 = vmatprep.subr.bf16.mxu0 %v525
    %717 = vmatpush1.bf16.msra.mxu0 %v524
    %718 = vmatprep.subr.bf16.mxu0 %v527
    %719 = vmatpush1.bf16.msra.mxu0 %v526
    %720 = vmatprep.subr.bf16.mxu0 %v529
    %721 = vmatpush1.bf16.msra.mxu0 %v528
    %722 = vmatprep.subr.bf16.mxu0 %v531
    %723 = vmatpush1.bf16.msra.mxu0 %v530
    %724 = vmatprep.subr.bf16.mxu0 %v533
    %725 = vmatpush1.bf16.msra.mxu0 %v532
    %726 = vmatprep.subr.bf16.mxu0 %v535
    %727 = vmatpush1.bf16.msra.mxu0 %v534
    %728 = vmatprep.mubr.bf16.mxu0 %v205
    %729 = vmatmul.mubr.bf16.gmra.mrb[0].mxu0 %v204
    %v730 = vpop.f32.mrb[0].mxu0
    %v731 = vadd.f32 %v188, %v730
    %v732 = vpop.f32.mrb[0].mxu0
    %v733 = vadd.f32 %v192, %v732
    %v734 = vpop.f32.mrb[0].mxu0
    %v735 = vpop.f32.mrb[0].mxu0
    %736 = vdwg.mxu0
    %737 = vmatprep.subr.bf16.mxu0 %v537
    %738 = vmatpush1.bf16.msra.mxu0 %v536
    %739 = vmatprep.subr.bf16.mxu0 %v539
    %740 = vmatpush1.bf16.msra.mxu0 %v538
    %741 = vmatprep.subr.bf16.mxu0 %v541
    %742 = vmatpush1.bf16.msra.mxu0 %v540
    %743 = vmatprep.subr.bf16.mxu0 %v543
    %744 = vmatpush1.bf16.msra.mxu0 %v542
    %745 = vmatprep.subr.bf16.mxu0 %v545
    %746 = vmatpush1.bf16.msra.mxu0 %v544
    %747 = vmatprep.subr.bf16.mxu0 %v547
    %748 = vmatpush1.bf16.msra.mxu0 %v546
    %749 = vmatprep.subr.bf16.mxu0 %v549
    %750 = vmatpush1.bf16.msra.mxu0 %v548
    %751 = vmatprep.subr.bf16.mxu0 %v551
    %752 = vmatpush1.bf16.msra.mxu0 %v550
    %753 = vmatprep.subr.bf16.mxu0 %v553
    %754 = vmatpush1.bf16.msra.mxu0 %v552
    %755 = vmatprep.subr.bf16.mxu0 %v555
    %756 = vmatpush1.bf16.msra.mxu0 %v554
    %757 = vmatprep.subr.bf16.mxu0 %v557
    %758 = vmatpush1.bf16.msra.mxu0 %v556
    %759 = vmatprep.subr.bf16.mxu0 %v559
    %760 = vmatpush1.bf16.msra.mxu0 %v558
    %761 = vmatprep.subr.bf16.mxu0 %v561
    %762 = vmatpush1.bf16.msra.mxu0 %v560
    %763 = vmatprep.subr.bf16.mxu0 %v563
    %764 = vmatpush1.bf16.msra.mxu0 %v562
    %765 = vmatprep.subr.bf16.mxu0 %v565
    %766 = vmatpush1.bf16.msra.mxu0 %v564
    %767 = vmatprep.subr.bf16.mxu0 %v567
    %768 = vmatpush1.bf16.msra.mxu0 %v566
    %769 = vmatprep.mubr.bf16.mxu0 %v207
    %770 = vmatmul.mubr.bf16.gmra.mrb[0].mxu0 %v206
    %v771 = vpop.f32.mrb[0].mxu0
    %v772 = vadd.f32 %v731, %v771
    %v773 = vpop.f32.mrb[0].mxu0
    %v774 = vadd.f32 %v733, %v773
    %v775 = vpop.f32.mrb[0].mxu0
    %v776 = vpop.f32.mrb[0].mxu0
    %777 = vdwg.mxu0
    %778 = vmatprep.subr.bf16.mxu0 %v569
    %779 = vmatpush1.bf16.msra.mxu0 %v568
    %780 = vmatprep.subr.bf16.mxu0 %v571
    %781 = vmatpush1.bf16.msra.mxu0 %v570
    %782 = vmatprep.subr.bf16.mxu0 %v573
    %783 = vmatpush1.bf16.msra.mxu0 %v572
    %784 = vmatprep.subr.bf16.mxu0 %v575
    %785 = vmatpush1.bf16.msra.mxu0 %v574
    %786 = vmatprep.subr.bf16.mxu0 %v577
    %787 = vmatpush1.bf16.msra.mxu0 %v576
    %788 = vmatprep.subr.bf16.mxu0 %v579
    %789 = vmatpush1.bf16.msra.mxu0 %v578
    %790 = vmatprep.subr.bf16.mxu0 %v581
    %791 = vmatpush1.bf16.msra.mxu0 %v580
    %792 = vmatprep.subr.bf16.mxu0 %v583
    %793 = vmatpush1.bf16.msra.mxu0 %v582
    %794 = vmatprep.subr.bf16.mxu0 %v585
    %795 = vmatpush1.bf16.msra.mxu0 %v584
    %796 = vmatprep.subr.bf16.mxu0 %v587
    %797 = vmatpush1.bf16.msra.mxu0 %v586
    %798 = vmatprep.subr.bf16.mxu0 %v589
    %799 = vmatpush1.bf16.msra.mxu0 %v588
    %800 = vmatprep.subr.bf16.mxu0 %v591
    %801 = vmatpush1.bf16.msra.mxu0 %v590
    %802 = vmatprep.subr.bf16.mxu0 %v593
    %803 = vmatpush1.bf16.msra.mxu0 %v592
    %804 = vmatprep.subr.bf16.mxu0 %v595
    %805 = vmatpush1.bf16.msra.mxu0 %v594
    %806 = vmatprep.subr.bf16.mxu0 %v597
    %807 = vmatpush1.bf16.msra.mxu0 %v596
    %808 = vmatprep.subr.bf16.mxu0 %v599
    %809 = vmatpush1.bf16.msra.mxu0 %v598
    %810 = vmatprep.mubr.bf16.mxu0 %v209
    %811 = vmatmul.mubr.bf16.gmra.mrb[0].mxu0 %v208
    %v812 = vpop.f32.mrb[0].mxu0
    %v813 = vadd.f32 %v772, %v812
    %v814 = vpop.f32.mrb[0].mxu0
    %v815 = vadd.f32 %v774, %v814
    %v816 = vpop.f32.mrb[0].mxu0
    %v817 = vpop.f32.mrb[0].mxu0
    %818 = vdwg.mxu0
    %v819 = vmax.f32 %v813, 0.0
    %v820 = vmax.f32 %v815, 0.0
    %v821 = vpack.c.bf16 %v819, %v819
    %v822 = vpack.c.bf16 %v820, %v820
    %v823 = vld [vmem:[#allocation8] sm:$0xf]
    %v824 = vld [vmem:[#allocation8 + $0x4] sm:$0xf]
    %v825 = vld [vmem:[#allocation8 + $0x8] sm:$0xf]
    %v826 = vld [vmem:[#allocation8 + $0xc] sm:$0xf]
    %v827 = vld [vmem:[#allocation8 + $0x10] sm:$0xf]
    %v828 = vld [vmem:[#allocation8 + $0x14] sm:$0xf]
    %v829 = vld [vmem:[#allocation8 + $0x18] sm:$0xf]
    %v830 = vld [vmem:[#allocation8 + $0x1c] sm:$0xf]
    %v831 = vld [vmem:[#allocation8 + $0x20] sm:$0xf]
    %v832 = vld [vmem:[#allocation8 + $0x24] sm:$0xf]
    %v833 = vld [vmem:[#allocation8 + $0x28] sm:$0xf]
    %v834 = vld [vmem:[#allocation8 + $0x2c] sm:$0xf]
    %v835 = vld [vmem:[#allocation8 + $0x30] sm:$0xf]
    %v836 = vld [vmem:[#allocation8 + $0x34] sm:$0xf]
    %v837 = vld [vmem:[#allocation8 + $0x38] sm:$0xf]
    %v838 = vld [vmem:[#allocation8 + $0x3c] sm:$0xf]
    %v839 = vld [vmem:[#allocation8 + $0x40] sm:$0xf]
    %v840 = vld [vmem:[#allocation8 + $0x44] sm:$0xf]
    %v841 = vld [vmem:[#allocation8 + $0x48] sm:$0xf]
    %v842 = vld [vmem:[#allocation8 + $0x4c] sm:$0xf]
    %v843 = vld [vmem:[#allocation8 + $0x50] sm:$0xf]
    %v844 = vld [vmem:[#allocation8 + $0x54] sm:$0xf]
    %v845 = vld [vmem:[#allocation8 + $0x58] sm:$0xf]
    %v846 = vld [vmem:[#allocation8 + $0x5c] sm:$0xf]
    %v847 = vld [vmem:[#allocation8 + $0x60] sm:$0xf]
    %v848 = vld [vmem:[#allocation8 + $0x64] sm:$0xf]
    %v849 = vld [vmem:[#allocation8 + $0x68] sm:$0xf]
    %v850 = vld [vmem:[#allocation8 + $0x6c] sm:$0xf]
    %v851 = vld [vmem:[#allocation8 + $0x70] sm:$0xf]
    %v852 = vld [vmem:[#allocation8 + $0x74] sm:$0xf]
    %v853 = vld [vmem:[#allocation8 + $0x78] sm:$0xf]
    %v854 = vld [vmem:[#allocation8 + $0x7c] sm:$0xf]
    %v855 = vld [vmem:[#allocation10] sm:$0x1]
    %v857 = vlaneseq
    %v858 = vshrl.u32 %v857, 7
    %v859 = vsub.s32 0, %v858
    %v860 = vrot.slane %v855, %v859
    %v894 = vunpack.c.l.b16 %v823
    %v895 = vunpack.c.l.b16 %v824
    %v896 = vunpack.c.l.b16 %v825
    %v897 = vunpack.c.l.b16 %v826
    %v898 = vunpack.c.l.b16 %v827
    %v899 = vunpack.c.l.b16 %v828
    %v900 = vunpack.c.l.b16 %v829
    %v901 = vunpack.c.l.b16 %v830
    %v902 = vunpack.c.l.b16 %v831
    %v903 = vunpack.c.l.b16 %v832
    %v904 = vunpack.c.l.b16 %v833
    %v905 = vunpack.c.l.b16 %v834
    %v906 = vunpack.c.l.b16 %v835
    %v907 = vunpack.c.l.b16 %v836
    %v908 = vunpack.c.l.b16 %v837
    %v909 = vunpack.c.l.b16 %v838
    %v910 = vunpack.c.l.b16 %v839
    %v911 = vunpack.c.l.b16 %v840
    %v912 = vunpack.c.l.b16 %v841
    %v913 = vunpack.c.l.b16 %v842
    %v914 = vunpack.c.l.b16 %v843
    %v915 = vunpack.c.l.b16 %v844
    %v916 = vunpack.c.l.b16 %v845
    %v917 = vunpack.c.l.b16 %v846
    %v918 = vunpack.c.l.b16 %v847
    %v919 = vunpack.c.l.b16 %v848
    %v920 = vunpack.c.l.b16 %v849
    %v921 = vunpack.c.l.b16 %v850
    %v922 = vunpack.c.l.b16 %v851
    %v923 = vunpack.c.l.b16 %v852
    %v924 = vunpack.c.l.b16 %v853
    %v925 = vunpack.c.l.b16 %v854
    %v926 = vpack.c.b16 %v895, %v894
    %v927 = vpack.c.b16 %v897, %v896
    %v928 = vpack.c.b16 %v899, %v898
    %v929 = vpack.c.b16 %v901, %v900
    %v930 = vpack.c.b16 %v903, %v902
    %v931 = vpack.c.b16 %v905, %v904
    %v932 = vpack.c.b16 %v907, %v906
    %v933 = vpack.c.b16 %v909, %v908
    %v934 = vpack.c.b16 %v911, %v910
    %v935 = vpack.c.b16 %v913, %v912
    %v936 = vpack.c.b16 %v915, %v914
    %v937 = vpack.c.b16 %v917, %v916
    %v938 = vpack.c.b16 %v919, %v918
    %v939 = vpack.c.b16 %v921, %v920
    %v940 = vpack.c.b16 %v923, %v922
    %v941 = vpack.c.b16 %v925, %v924
    %958 = vmatprep.subr.bf16.mxu0 0
    %959 = vmatpush1.bf16.msra.mxu0 %v926
    %960 = vmatprep.subr.bf16.mxu0 0
    %961 = vmatpush1.bf16.msra.mxu0 %v927
    %962 = vmatprep.subr.bf16.mxu0 0
    %963 = vmatpush1.bf16.msra.mxu0 %v928
    %964 = vmatprep.subr.bf16.mxu0 0
    %965 = vmatpush1.bf16.msra.mxu0 %v929
    %966 = vmatprep.subr.bf16.mxu0 0
    %967 = vmatpush1.bf16.msra.mxu0 %v930
    %968 = vmatprep.subr.bf16.mxu0 0
    %969 = vmatpush1.bf16.msra.mxu0 %v931
    %970 = vmatprep.subr.bf16.mxu0 0
    %971 = vmatpush1.bf16.msra.mxu0 %v932
    %972 = vmatprep.subr.bf16.mxu0 0
    %973 = vmatpush1.bf16.msra.mxu0 %v933
    %974 = vmatprep.subr.bf16.mxu0 0
    %975 = vmatpush1.bf16.msra.mxu0 %v934
    %976 = vmatprep.subr.bf16.mxu0 0
    %977 = vmatpush1.bf16.msra.mxu0 %v935
    %978 = vmatprep.subr.bf16.mxu0 0
    %979 = vmatpush1.bf16.msra.mxu0 %v936
    %980 = vmatprep.subr.bf16.mxu0 0
    %981 = vmatpush1.bf16.msra.mxu0 %v937
    %982 = vmatprep.subr.bf16.mxu0 0
    %983 = vmatpush1.bf16.msra.mxu0 %v938
    %984 = vmatprep.subr.bf16.mxu0 0
    %985 = vmatpush1.bf16.msra.mxu0 %v939
    %986 = vmatprep.subr.bf16.mxu0 0
    %987 = vmatpush1.bf16.msra.mxu0 %v940
    %988 = vmatprep.subr.bf16.mxu0 0
    %989 = vmatpush1.bf16.msra.mxu0 %v941
    %990 = vmatprep.mubr.bf16.mxu0 %v822
    %991 = vmatmul.mubr.bf16.gmra.mrb[0].mxu0 %v821
    %v992 = vpop.f32.mrb[0].mxu0
    %v993 = vadd.f32 %v860, %v992
    %v994 = vpop.f32.mrb[0].mxu0
    %v995 = vpop.f32.mrb[0].mxu0
    %v996 = vpop.f32.mrb[0].mxu0
    %997 = vdwg.mxu0
    %998 = vst [vmem:[#allocation11] sm:$0xff] %v993
    // Predicated region
    $region42: #{tpu_custom_call.1} parent=1 // pred_check
      _
    $region43: #{tpu_custom_call.1} parent=1 // pred_check_branch
      %1000 = sbr.rel (0) target = $region45
    $region44: #{tpu_custom_call.1} parent=1 // pred_region
      %s1002 = ssub.s32 128, 128
      %1003 = vsyncadd [#allocation4], %s1002
      %s1005 = sshll.u32 [#allocation11], 4
      %s1006 = int_to_ptr.vmem [resolvable:$true] %s1005
      %1008 = dma.vmem_to_hbm [thread:$0]  %s1006, 128, %s5, [#allocation4]
    $region45: #{tpu_custom_call.1} parent=1 // pred_fallthru
      _
    // Predicated region
    $region46: #{tpu_custom_call.1} parent=1 // pred_check
      _
    $region47: #{tpu_custom_call.1} parent=1 // pred_check_branch
      %1010 = sbr.rel (0) target = $region49
    $region48: #{tpu_custom_call.1} parent=1 // pred_region
      %1011 = dma.done [#allocation4], 128
    $region49: #{tpu_custom_call.1} parent=1 // pred_fallthru
      _
    %1012 = vsyncpa [#allocation3], 1
    %1013 = vsyncpa [#allocation6], 1
    %1014 = vsyncpa [#allocation9], 1
    %1015 = vsyncpa [#allocation4], 1

</llo_original>
